<compile_context>
chip_gen: v6e
topology: v6e:2x2x1
jax: 0.10.0
libtpu: 0.0.40
codegen_flags: <defaults>
</compile_context>

<pallas_src>
import jax
import jax.numpy as jnp
from jax.experimental import pallas as pl
from jax.experimental.pallas import tpu as pltpu

HIDDEN = 32            # args.hidden_size * args.number_of_molecules (first_linear_dim)
HEXT = HIDDEN + 8      # h_ext: [h | temps | zero-pad] -> 40 columns (sublane-friendly views)
FFN_HIDDEN = 32        # args.ffn_hidden_size (ffn_num_layers = 2)
NUM_TASKS = 1
OUT_SIZE = NUM_TASKS * 4   # outputmode == 'slimnet' -> output_size *= 4
MLP_HIDDEN = 200           # mlp: Linear(2, 200) -> Softplus -> Linear(200, 1) -> Softplus
MLP_PAD = 256              # 200 padded up to a full lane multiple

# Row layout of the single resident weight pack [PACK_ROWS, MLP_PAD]
R_W1 = 0                       # rows 0:40,  lanes 0:32  = W1 (rows >= HIDDEN are zero)
R_W2 = HEXT                    # rows 40:72, lanes 0:4   = W2
R_B1 = R_W2 + FFN_HIDDEN       # row 72,     lanes 0:32  = b1
R_B2 = R_B1 + 1                # row 73,     lanes 0:4   = b2
R_MW1A = R_B2 + 1              # row 74,     lanes 0:200 = Wm1[0, :]  (phi_theta weight)
R_MW1B = R_MW1A + 1            # row 75,     lanes 0:200 = Wm1[1, :]  (temps weight)
R_MB1 = R_MW1B + 1             # row 76,     lanes 0:200 = bm1
R_MW2T = R_MB1 + 1             # row 77,     lanes 0:200 = Wm2[:, 0] (transposed)
R_MB2 = R_MW2T + 1             # row 78,     lane 0      = bm2
PACK_ROWS = 80                 # row 79 is zero padding


def _softplus(x):
    # Branch-free, numerically stable softplus. Matches torch.nn.Softplus
    # (beta=1, threshold=20) to < 3e-9 absolute for all x.
    return jnp.maximum(x, 0.0) + jnp.log1p(jnp.exp(-jnp.abs(x)))


def _softplus_ref(x):
    # torch.nn.Softplus(beta=1, threshold=20): x if x > 20 else log(1 + exp(x))
    return jnp.where(x > 20.0, x, jnp.log1p(jnp.exp(jnp.minimum(x, 20.0))))


def molecule_model_kernel(x_ref, w_ref, out_ref):
    x = x_ref[...]                                       # [TB, HEXT]; col HIDDEN holds temps

    # FFN parameters: static views of the resident weight pack.
    w1 = w_ref[R_W1:R_W1 + HEXT, 0:FFN_HIDDEN]           # [40, 32] (temps/pad rows are zero)
    w2 = w_ref[R_W2:R_W2 + FFN_HIDDEN, 0:FFN_HIDDEN]     # [32, 32] (lanes >= 4 are zero)
    b1 = w_ref[R_B1:R_B1 + 1, 0:FFN_HIDDEN]              # [1, 32]
    b2 = w_ref[R_B2:R_B2 + 1, 0:FFN_HIDDEN]              # [1, 32] (lanes >= 4 are zero)

    # FFN: Dropout(0) -> Linear -> ReLU -> Dropout(0) -> Linear
    z1 = jnp.dot(x, w1, preferred_element_type=jnp.float32) + b1
    a1 = jnp.maximum(z1, 0.0)                            # ReLU
    ffn_full = jnp.dot(a1, w2, preferred_element_type=jnp.float32) + b2     # [TB, 32]
    ffn_out = ffn_full[:, 0:OUT_SIZE]                    # [TB, 4]

    # slimnet branch: phi_theta is lane 3 of the FFN dot we already computed,
    # temps is the folded column of the activation block.
    phi_theta = ffn_full[:, 3:4]                         # [TB, 1]
    temps = x[:, HIDDEN:HIDDEN + 1]                      # [TB, 1]

    mw1a = w_ref[R_MW1A:R_MW1A + 1, :]                   # [1, 256]
    mw1b = w_ref[R_MW1B:R_MW1B + 1, :]                   # [1, 256]
    mb1 = w_ref[R_MB1:R_MB1 + 1, :]                      # [1, 256]
    mw2t = w_ref[R_MW2T:R_MW2T + 1, :]                   # [1, 256] (lanes >= 200 are zero)
    mb2 = w_ref[R_MB2:R_MB2 + 1, 0:1]                    # [1, 1]

    # mi @ Wm1 expanded as two rank-1 outer products (avoids a 2-lane contraction).
    m1 = _softplus(phi_theta * mw1a + temps * mw1b + mb1)                   # [TB, 256]
    # 200->1 contraction: VPU multiply + XLU lane reduce, co-issued under the
    # EUP-bound softplus above (zero-padded mw2t lanes kill the padded columns).
    m2 = _softplus(jnp.sum(m1 * mw2t, axis=-1, keepdims=True) + mb2)        # [TB, 1]

    # output = cat(alpha, beta, gamma, mlp(mi)): replace column 3 with m2.
    col = jax.lax.broadcasted_iota(jnp.int32, ffn_out.shape, 1)             # [TB, 4]
    out_ref[...] = jnp.where(col == 3, m2, ffn_out)


def pack_params(params):
    """Collapse the 9 small parameter tensors into a single [80, 256] f32 pack."""
    w1, b1, w2, b2, mw1, mb1, mw2, mb2 = params
    pack = jnp.zeros((PACK_ROWS, MLP_PAD), jnp.float32)
    pack = pack.at[R_W1:R_W1 + HIDDEN, 0:FFN_HIDDEN].set(w1)        # rows HIDDEN:HEXT stay zero
    pack = pack.at[R_W2:R_W2 + FFN_HIDDEN, 0:OUT_SIZE].set(w2)
    pack = pack.at[R_B1, 0:FFN_HIDDEN].set(b1[0])
    pack = pack.at[R_B2, 0:OUT_SIZE].set(b2[0])
    pack = pack.at[R_MW1A, 0:MLP_HIDDEN].set(mw1[0])
    pack = pack.at[R_MW1B, 0:MLP_HIDDEN].set(mw1[1])
    pack = pack.at[R_MB1, 0:MLP_HIDDEN].set(mb1[0])
    pack = pack.at[R_MW2T, 0:MLP_HIDDEN].set(mw2[:, 0])
    pack = pack.at[R_MB2, 0].set(mb2[0, 0])
    return pack


def _round_up(x, m):
    return ((x + m - 1) // m) * m


def molecule_model_forward(h, temps, params, *, tile_b=2048):
    """h: [B, HIDDEN] encoder output; temps: [B, 1]; returns [B, 4]."""
    b = h.shape[0]
    pack = pack_params(params)

    # Fold temps into the activations as column HIDDEN of a single [B, HEXT] block.
    x = jnp.zeros((b, HEXT), jnp.float32)
    x = x.at[:, 0:HIDDEN].set(h.astype(jnp.float32))
    x = x.at[:, HIDDEN].set(temps[:, 0].astype(jnp.float32))

    # Batch tile: multiple of 8 (sublane rule); cap so the grid has >= 2 steps
    # whenever B > 8, so the "parallel" batch axis shards across both TCs on v7x.
    tile_b = _round_up(max(int(tile_b), 8), 8)
    half = _round_up(pl.cdiv(b, 2), 8)
    tb = max(8, min(tile_b, half))
    b_pad = _round_up(b, tb)
    if b_pad != b:
        x = jnp.pad(x, ((0, b_pad - b), (0, 0)))

    out = pl.pallas_call(
        molecule_model_kernel,
        out_shape=jax.ShapeDtypeStruct((b_pad, OUT_SIZE), jnp.float32),
        grid_spec=pltpu.PrefetchScalarGridSpec(
            num_scalar_prefetch=0,
            grid=(b_pad // tb,),
            in_specs=[
                pl.BlockSpec((tb, HEXT), lambda i: (i, 0)),             # activations+temps (streamed)
                pl.BlockSpec((PACK_ROWS, MLP_PAD), lambda i: (0, 0)),   # packed weights (resident)
            ],
            out_specs=pl.BlockSpec((tb, OUT_SIZE), lambda i: (i, 0)),
        ),
        compiler_params=pltpu.CompilerParams(
            dimension_semantics=("parallel",)),   # shard batch grid across TCs on v7x
    )(x, pack)
    return out[:b]


def reference_forward(h, temps, params):
    w1, b1, w2, b2, mw1, mb1, mw2, mb2 = params
    a1 = jnp.maximum(h @ w1 + b1, 0.0)
    ffn_out = a1 @ w2 + b2
    mi = jnp.concatenate([ffn_out[:, 3:4], temps], axis=1)
    m1 = _softplus_ref(mi @ mw1 + mb1)
    m2 = _softplus_ref(m1 @ mw2 + mb2)
    return jnp.concatenate([ffn_out[:, 0:3], m2], axis=1)


def init_params(key):
    # initialize_weights(): xavier_normal weights, zero biases.
    ks = jax.random.split(key, 4)

    def xavier(k, fan_in, fan_out):
        std = (2.0 / (fan_in + fan_out)) ** 0.5
        return std * jax.random.normal(k, (fan_in, fan_out), dtype=jnp.float32)

    w1 = xavier(ks[0], HIDDEN, FFN_HIDDEN)
    b1 = jnp.zeros((1, FFN_HIDDEN), jnp.float32)
    w2 = xavier(ks[1], FFN_HIDDEN, OUT_SIZE)
    b2 = jnp.zeros((1, OUT_SIZE), jnp.float32)
    mw1 = xavier(ks[2], 2, MLP_HIDDEN)
    mb1 = jnp.zeros((1, MLP_HIDDEN), jnp.float32)
    mw2 = xavier(ks[3], MLP_HIDDEN, 1)
    mb2 = jnp.zeros((1, 1), jnp.float32)
    return (w1, b1, w2, b2, mw1, mb1, mw2, mb2)


if __name__ == "__main__":
    key = jax.random.PRNGKey(0)
    k_h, k_t, k_p = jax.random.split(key, 3)
    params = init_params(k_p)

    # Stand-in for MPN encoder output (see TODO(synk) above).
    def make_inputs(kh, kt, batch):
        h = jax.random.normal(kh, (batch, HIDDEN), dtype=jnp.float32)
        temps = jax.random.uniform(kt, (batch, 1), dtype=jnp.float32,
                                   minval=250.0, maxval=350.0) / 100.0
        return h, temps

    # Small case (single grid step).
    h, temps = make_inputs(k_h, k_t, 8)
    out = jax.block_until_ready(molecule_model_forward(h, temps, params))
    ref = jax.block_until_ready(reference_forward(h, temps, params))
    assert out.shape == (8, OUT_SIZE) and out.dtype == jnp.float32
    assert jnp.allclose(out, ref, atol=1e-4, rtol=1e-4), (out, ref)

    # Multi-step case (exercises >=2 grid steps, megacore split and batch padding).
    h2, temps2 = make_inputs(k_t, k_h, 100)
    out2 = jax.block_until_ready(molecule_model_forward(h2, temps2, params))
    ref2 = jax.block_until_ready(reference_forward(h2, temps2, params))
    assert out2.shape == (100, OUT_SIZE)
    assert jnp.allclose(out2, ref2, atol=1e-4, rtol=1e-4), (out2, ref2)

    print("KERNEL_OK")
</pallas_src>

<mosaic_0001>
module attributes {stable_mosaic.version = 11 : i64} {
  func.func @molecule_model_kernel(%arg0: i32, %arg1: memref<8x40xf32, #tpu.memory_space<vmem>>, %arg2: memref<80x256xf32, #tpu.memory_space<vmem>>, %arg3: memref<8x4xf32, #tpu.memory_space<vmem>>) attributes {dimension_semantics = [#tpu.dimension_semantics<parallel>], iteration_bounds = array<i64: 1>, scalar_prefetch = 0 : i64, scratch_operands = 0 : i64, tpu.core_type = #tpu.core_type<tc>, window_params = [{transform_indices = @transform_0, window_bounds = array<i64: 8, 40>}, {pipeline_mode = #tpu.pipeline_mode<synchronous>, transform_indices = @transform_1, window_bounds = array<i64: 80, 256>}, {transform_indices = @transform_2, window_bounds = array<i64: 8, 4>}]} {
    %c0 = arith.constant 0 : index
    %c0_0 = arith.constant 0 : index
    %0 = vector.load %arg1[%c0, %c0_0] : memref<8x40xf32, #tpu.memory_space<vmem>>, vector<8x40xf32>
    %c0_1 = arith.constant 0 : index
    %c0_2 = arith.constant 0 : index
    %1 = vector.load %arg2[%c0_1, %c0_2] : memref<80x256xf32, #tpu.memory_space<vmem>>, vector<40x32xf32>
    %c40 = arith.constant 40 : index
    %c0_3 = arith.constant 0 : index
    %2 = vector.load %arg2[%c40, %c0_3] : memref<80x256xf32, #tpu.memory_space<vmem>>, vector<32x32xf32>
    %c72 = arith.constant 72 : index
    %c0_4 = arith.constant 0 : index
    %3 = vector.load %arg2[%c72, %c0_4] : memref<80x256xf32, #tpu.memory_space<vmem>>, vector<1x32xf32>
    %c73 = arith.constant 73 : index
    %c0_5 = arith.constant 0 : index
    %4 = vector.load %arg2[%c73, %c0_5] : memref<80x256xf32, #tpu.memory_space<vmem>>, vector<1x32xf32>
    %cst = arith.constant dense<0.000000e+00> : vector<8x32xf32>
    %5 = tpu.matmul %0, %1, %cst {dimension_numbers = #tpu.dot_dimension_numbers<[1], [0], [0], [1], [0, 0, 1, 1], [], []>} : vector<8x40xf32>, vector<40x32xf32>, vector<8x32xf32> -> vector<8x32xf32>
    %6 = vector.broadcast %3 : vector<1x32xf32> to vector<8x32xf32>
    %7 = arith.addf %5, %6 : vector<8x32xf32>
    %cst_6 = arith.constant 0.000000e+00 : f32
    %8 = vector.broadcast %cst_6 : f32 to vector<8x32xf32>
    %9 = arith.maximumf %7, %8 : vector<8x32xf32>
    %cst_7 = arith.constant dense<0.000000e+00> : vector<8x32xf32>
    %10 = tpu.matmul %9, %2, %cst_7 {dimension_numbers = #tpu.dot_dimension_numbers<[1], [0], [0], [1], [0, 0, 1, 1], [], []>} : vector<8x32xf32>, vector<32x32xf32>, vector<8x32xf32> -> vector<8x32xf32>
    %11 = vector.broadcast %4 : vector<1x32xf32> to vector<8x32xf32>
    %12 = arith.addf %10, %11 : vector<8x32xf32>
    %13 = vector.extract_strided_slice %12 {offsets = [0, 0], sizes = [8, 4], strides = [1, 1]} : vector<8x32xf32> to vector<8x4xf32>
    %14 = vector.extract_strided_slice %12 {offsets = [0, 3], sizes = [8, 1], strides = [1, 1]} : vector<8x32xf32> to vector<8x1xf32>
    %15 = vector.extract_strided_slice %0 {offsets = [0, 32], sizes = [8, 1], strides = [1, 1]} : vector<8x40xf32> to vector<8x1xf32>
    %c74 = arith.constant 74 : index
    %c0_8 = arith.constant 0 : index
    %16 = vector.load %arg2[%c74, %c0_8] : memref<80x256xf32, #tpu.memory_space<vmem>>, vector<1x256xf32>
    %c75 = arith.constant 75 : index
    %c0_9 = arith.constant 0 : index
    %17 = vector.load %arg2[%c75, %c0_9] : memref<80x256xf32, #tpu.memory_space<vmem>>, vector<1x256xf32>
    %c76 = arith.constant 76 : index
    %c0_10 = arith.constant 0 : index
    %18 = vector.load %arg2[%c76, %c0_10] : memref<80x256xf32, #tpu.memory_space<vmem>>, vector<1x256xf32>
    %c77 = arith.constant 77 : index
    %c0_11 = arith.constant 0 : index
    %19 = vector.load %arg2[%c77, %c0_11] : memref<80x256xf32, #tpu.memory_space<vmem>>, vector<1x256xf32>
    %c78 = arith.constant 78 : index
    %c0_12 = arith.constant 0 : index
    %20 = vector.load %arg2[%c78, %c0_12] : memref<80x256xf32, #tpu.memory_space<vmem>>, vector<1x1xf32>
    %21 = vector.broadcast %14 : vector<8x1xf32> to vector<8x256xf32>
    %22 = vector.broadcast %16 : vector<1x256xf32> to vector<8x256xf32>
    %23 = arith.mulf %21, %22 : vector<8x256xf32>
    %24 = vector.broadcast %15 : vector<8x1xf32> to vector<8x256xf32>
    %25 = vector.broadcast %17 : vector<1x256xf32> to vector<8x256xf32>
    %26 = arith.mulf %24, %25 : vector<8x256xf32>
    %27 = arith.addf %23, %26 : vector<8x256xf32>
    %28 = vector.broadcast %18 : vector<1x256xf32> to vector<8x256xf32>
    %29 = arith.addf %27, %28 : vector<8x256xf32>
    %cst_13 = arith.constant 0.000000e+00 : f32
    %30 = vector.broadcast %cst_13 : f32 to vector<8x256xf32>
    %31 = arith.maximumf %29, %30 : vector<8x256xf32>
    %32 = math.absf %29 : vector<8x256xf32>
    %cst_14 = arith.constant 0.000000e+00 : f32
    %33 = vector.broadcast %cst_14 : f32 to vector<8x256xf32>
    %34 = arith.subf %33, %32 : vector<8x256xf32>
    %35 = math.exp %34 : vector<8x256xf32>
    %36 = math.log1p %35 : vector<8x256xf32>
    %37 = arith.addf %31, %36 : vector<8x256xf32>
    %38 = vector.broadcast %19 : vector<1x256xf32> to vector<8x256xf32>
    %39 = arith.mulf %37, %38 : vector<8x256xf32>
    %cst_15 = arith.constant dense<0.000000e+00> : vector<8xf32>
    %40 = vector.multi_reduction <add>, %39, %cst_15 [1] : vector<8x256xf32> to vector<8xf32>
    %41 = vector.shape_cast %40 : vector<8xf32> to vector<8x1xf32>
    %42 = vector.broadcast %20 : vector<1x1xf32> to vector<8x1xf32>
    %43 = arith.addf %41, %42 : vector<8x1xf32>
    %cst_16 = arith.constant 0.000000e+00 : f32
    %44 = vector.broadcast %cst_16 : f32 to vector<8x1xf32>
    %45 = arith.maximumf %43, %44 : vector<8x1xf32>
    %46 = math.absf %43 : vector<8x1xf32>
    %cst_17 = arith.constant 0.000000e+00 : f32
    %47 = vector.broadcast %cst_17 : f32 to vector<8x1xf32>
    %48 = arith.subf %47, %46 : vector<8x1xf32>
    %49 = math.exp %48 : vector<8x1xf32>
    %50 = math.log1p %49 : vector<8x1xf32>
    %51 = arith.addf %45, %50 : vector<8x1xf32>
    %52 = tpu.iota {dimensions = array<i32: 1>} : vector<8x4xi32>
    %c3_i32 = arith.constant 3 : i32
    %53 = vector.broadcast %c3_i32 : i32 to vector<8x4xi32>
    %54 = arith.cmpi eq, %52, %53 : vector<8x4xi32>
    %55 = vector.shape_cast %51 : vector<8x1xf32> to vector<8x1xf32>
    %56 = vector.broadcast %55 : vector<8x1xf32> to vector<8x4xf32>
    %57 = arith.select %54, %56, %13 : vector<8x4xi1>, vector<8x4xf32>
    %c0_18 = arith.constant 0 : index
    %c0_19 = arith.constant 0 : index
    %58 = vector.load %arg3[%c0_18, %c0_19] : memref<8x4xf32, #tpu.memory_space<vmem>>, vector<8x4xf32>
    tpu.vector_store %arg3[%c0_18, %c0_19], %57 {strides = array<i32>} : memref<8x4xf32, #tpu.memory_space<vmem>>, vector<8x4xf32>,
    return
  }
  func.func @transform_0(%arg0: i32) -> (i32, i32) {
    %c0_i32 = arith.constant 0 : i32
    %c0_i32_0 = arith.constant 0 : i32
    return %arg0, %c0_i32 : i32, i32
  }
  func.func @transform_1(%arg0: i32) -> (i32, i32) {
    %c0_i32 = arith.constant 0 : i32
    %c0_i32_0 = arith.constant 0 : i32
    %c0_i32_1 = arith.constant 0 : i32
    return %c0_i32, %c0_i32_0 : i32, i32
  }
  func.func @transform_2(%arg0: i32) -> (i32, i32) {
    %c0_i32 = arith.constant 0 : i32
    %c0_i32_0 = arith.constant 0 : i32
    return %arg0, %c0_i32 : i32, i32
  }
}

</mosaic_0001>

<llo_original>
// kernel: tpu_custom_call.1
$region0: #{tpu_custom_call.1}
  #allocation0 [shape = 'u32[]', space=smem, size = 0x4, offset = 0x4, fixed_abs, tag = 'smem constant byte address 0x4 - core index']
  #allocation1 [shape = 'u32[144,128]{1,0:T(1,128)}', space=vmem, size = 0x12000, scoped, tag = 'internal scratch']
  %s0 = inlined_call_operand.hbm [shape: f32[8,40], index: 0, kind: input, shape index: {}]
  %s1 = inlined_call_operand.hbm [shape: f32[80,256], index: 1, kind: input, shape index: {}]
  %s2 = inlined_call_operand.vmem [shape: f32[8,4], index: 2, kind: output, shape index: {}]
  %s3 = sld [smem:[#allocation0]]
  $region26: #{tpu_custom_call.1} parent=0
    _
  %s5 = ssub.s32 1, %s3
  %s6 = scalar_select 0, %s5, %s3
  $region1: #{tpu_custom_call.1} parent=0
    #allocation2 [shape = 'u8[4096]{0}', space=vmem, size = 0x1000, scoped, tag = 'input window, operand 0, single buffered']
    #allocation3 [shape = 's32[1]{0}', space=sflag, size = 0x4, scoped, tag = 'scoped memory for tpu_custom_call.1']
    #allocation4 [shape = 'u8[81920]{0}', space=vmem, size = 0x14000, scoped, tag = 'input window, operand 1, single buffered']
    #allocation5 [shape = 's32[1]{0}', space=sflag, size = 0x4, scoped, tag = 'scoped memory for tpu_custom_call.1']
    %7 = vsyncpa [#allocation3], 0
    %8 = vsyncpa [#allocation5], 0
    // Predicated region
    $region2: #{tpu_custom_call.1} parent=1 // pred_check
      _
    $region3: #{tpu_custom_call.1} parent=1 // pred_check_branch
      %10 = sbr.rel (0) target = $region5
    $region4: #{tpu_custom_call.1} parent=1 // pred_region
      %s12 = ssub.s32 128, 128
      %13 = vsyncadd [#allocation3], %s12
      %s15 = sshll.u32 [#allocation2], 4
      %s16 = int_to_ptr.vmem [resolvable:$true] %s15
      %18 = dma.hbm_to_vmem [thread:$0]  %s0, 128, %s16, [#allocation3]
    $region5: #{tpu_custom_call.1} parent=1 // pred_fallthru
      _
    // Predicated region
    $region6: #{tpu_custom_call.1} parent=1 // pred_check
      _
    $region7: #{tpu_custom_call.1} parent=1 // pred_check_branch
      %20 = sbr.rel (0) target = $region9
    $region8: #{tpu_custom_call.1} parent=1 // pred_region
      %s22 = ssub.s32 2560, 2560
      %23 = vsyncadd [#allocation5], %s22
      %s24 = sshll.u32 [#allocation4], 4
      %s25 = int_to_ptr.vmem [resolvable:$true] %s24
      %30 = dma.hbm_to_vmem [thread:$0]  %s1, 2560, %s25, [#allocation5], 256, 256, 16
    $region9: #{tpu_custom_call.1} parent=1 // pred_fallthru
      _
    // Predicated region
    $region10: #{tpu_custom_call.1} parent=1 // pred_check
      _
    $region11: #{tpu_custom_call.1} parent=1 // pred_check_branch
      %32 = sbr.rel (0) target = $region13
    $region12: #{tpu_custom_call.1} parent=1 // pred_region
      %33 = dma.done [#allocation3], 128
    $region13: #{tpu_custom_call.1} parent=1 // pred_fallthru
      _
    // Predicated region
    $region14: #{tpu_custom_call.1} parent=1 // pred_check
      _
    $region15: #{tpu_custom_call.1} parent=1 // pred_check_branch
      %35 = sbr.rel (0) target = $region17
    $region16: #{tpu_custom_call.1} parent=1 // pred_region
      %36 = dma.done [#allocation5], 2560
    $region17: #{tpu_custom_call.1} parent=1 // pred_fallthru
      _
    %v37 = vld [vmem:[#allocation2] sm:$0xff]
    %v38 = vld [vmem:[#allocation4] sm:$0xff]
    %v39 = vld [vmem:[#allocation4 + $0x10] sm:$0xff]
    %v40 = vld [vmem:[#allocation4 + $0x20] sm:$0xff]
    %v41 = vld [vmem:[#allocation4 + $0x30] sm:$0xff]
    %v42 = vld [vmem:[#allocation4 + $0x40] sm:$0xff]
    %v43 = vld [vmem:[#allocation4 + $0x50] sm:$0xff]
    %v44 = vld [vmem:[#allocation4 + $0x60] sm:$0xff]
    %v45 = vld [vmem:[#allocation4 + $0x70] sm:$0xff]
    %v46 = vld [vmem:[#allocation4 + $0x80] sm:$0xff]
    %v47 = vld [vmem:[#allocation4 + $0x90] ss:$0 sm:$0xff]
    %v48 = vld [vmem:[#allocation4 + $0x91] ss:$0 sm:$0xff]
    %vm49 = vcmask 326656
    %v51 = vsel %vm49, %v37, 0
    %53 = vmatprep.subr.mxu0 0.0
    %54 = vmatpush1.msra.mxu0 0.0
    %55 = vmatprep.subr.mxu0 0.0
    %56 = vmatpush1.msra.mxu0 0.0
    %57 = vmatprep.subr.mxu0 0.0
    %58 = vmatpush1.msra.mxu0 0.0
    %59 = vmatprep.subr.mxu0 0.0
    %60 = vmatpush1.msra.mxu0 0.0
    %61 = vmatprep.subr.mxu0 0.0
    %62 = vmatpush1.msra.mxu0 0.0
    %63 = vmatprep.subr.mxu0 0.0
    %64 = vmatpush1.msra.mxu0 0.0
    %65 = vmatprep.subr.mxu0 0.0
    %66 = vmatpush1.msra.mxu0 0.0
    %67 = vmatprep.subr.mxu0 0.0
    %68 = vmatpush1.msra.mxu0 0.0
    %69 = vmatprep.subr.mxu0 0.0
    %70 = vmatpush1.msra.mxu0 0.0
    %71 = vmatprep.subr.mxu0 0.0
    %72 = vmatpush1.msra.mxu0 0.0
    %73 = vmatprep.subr.mxu0 0.0
    %74 = vmatpush1.msra.mxu0 0.0
    %75 = vmatprep.subr.mxu0 0.0
    %76 = vmatpush1.msra.mxu0 %v42
    %77 = vmatprep.subr.mxu0 0.0
    %78 = vmatpush1.msra.mxu0 %v41
    %79 = vmatprep.subr.mxu0 0.0
    %80 = vmatpush1.msra.mxu0 %v40
    %81 = vmatprep.subr.mxu0 0.0
    %82 = vmatpush1.msra.mxu0 %v39
    %83 = vmatprep.subr.mxu0 0.0
    %84 = vmatpush1.msra.mxu0 %v38
    %85 = vmatprep.subr.mxu0 0.0
    %86 = vmatpush2.msra.mxu0 0.0
    %87 = vmatprep.subr.mxu0 0.0
    %88 = vmatpush2.msra.mxu0 0.0
    %89 = vmatprep.subr.mxu0 0.0
    %90 = vmatpush2.msra.mxu0 0.0
    %91 = vmatprep.subr.mxu0 0.0
    %92 = vmatpush2.msra.mxu0 0.0
    %93 = vmatprep.subr.mxu0 0.0
    %94 = vmatpush2.msra.mxu0 0.0
    %95 = vmatprep.subr.mxu0 0.0
    %96 = vmatpush2.msra.mxu0 0.0
    %97 = vmatprep.subr.mxu0 0.0
    %98 = vmatpush2.msra.mxu0 0.0
    %99 = vmatprep.subr.mxu0 0.0
    %100 = vmatpush2.msra.mxu0 0.0
    %101 = vmatprep.subr.mxu0 0.0
    %102 = vmatpush2.msra.mxu0 0.0
    %103 = vmatprep.subr.mxu0 0.0
    %104 = vmatpush2.msra.mxu0 0.0
    %105 = vmatprep.subr.mxu0 0.0
    %106 = vmatpush2.msra.mxu0 0.0
    %107 = vmatprep.subr.mxu0 0.0
    %108 = vmatpush2.msra.mxu0 0.0
    %109 = vmatprep.subr.mxu0 0.0
    %110 = vmatpush2.msra.mxu0 0.0
    %111 = vmatprep.subr.mxu0 0.0
    %112 = vmatpush2.msra.mxu0 0.0
    %113 = vmatprep.subr.mxu0 0.0
    %114 = vmatpush2.msra.mxu0 0.0
    %115 = vmatprep.subr.mxu0 0.0
    %116 = vmatpush2.msra.mxu0 0.0
    %117 = vmatprep.mubr.f32.mxu0 0.0
    %118 = vmatmul.mubr.f32.gmra.mxu0 %v51
    %v119 = vpop.f32.mrf.mxu0
    %v120 = vadd.f32 %v47, %v119
    %v121 = vpop.f32.mrf.mxu0
    %122 = vdwg.mxu0
    %v123 = vmax.f32 %v120, 0.0
    %vm124 = vcmask 261120
    %v126 = vsel %vm124, %v123, 0
    %128 = vmatprep.subr.mxu0 0.0
    %129 = vmatpush1.msra.mxu0 0.0
    %130 = vmatprep.subr.mxu0 0.0
    %131 = vmatpush1.msra.mxu0 0.0
    %132 = vmatprep.subr.mxu0 0.0
    %133 = vmatpush1.msra.mxu0 0.0
    %134 = vmatprep.subr.mxu0 0.0
    %135 = vmatpush1.msra.mxu0 0.0
    %136 = vmatprep.subr.mxu0 0.0
    %137 = vmatpush1.msra.mxu0 0.0
    %138 = vmatprep.subr.mxu0 0.0
    %139 = vmatpush1.msra.mxu0 0.0
    %140 = vmatprep.subr.mxu0 0.0
    %141 = vmatpush1.msra.mxu0 0.0
    %142 = vmatprep.subr.mxu0 0.0
    %143 = vmatpush1.msra.mxu0 0.0
    %144 = vmatprep.subr.mxu0 0.0
    %145 = vmatpush1.msra.mxu0 0.0
    %146 = vmatprep.subr.mxu0 0.0
    %147 = vmatpush1.msra.mxu0 0.0
    %148 = vmatprep.subr.mxu0 0.0
    %149 = vmatpush1.msra.mxu0 0.0
    %150 = vmatprep.subr.mxu0 0.0
    %151 = vmatpush1.msra.mxu0 0.0
    %152 = vmatprep.subr.mxu0 0.0
    %153 = vmatpush1.msra.mxu0 %v46
    %154 = vmatprep.subr.mxu0 0.0
    %155 = vmatpush1.msra.mxu0 %v45
    %156 = vmatprep.subr.mxu0 0.0
    %157 = vmatpush1.msra.mxu0 %v44
    %158 = vmatprep.subr.mxu0 0.0
    %159 = vmatpush1.msra.mxu0 %v43
    %160 = vmatprep.subr.mxu0 0.0
    %161 = vmatpush2.msra.mxu0 0.0
    %162 = vmatprep.subr.mxu0 0.0
    %163 = vmatpush2.msra.mxu0 0.0
    %164 = vmatprep.subr.mxu0 0.0
    %165 = vmatpush2.msra.mxu0 0.0
    %166 = vmatprep.subr.mxu0 0.0
    %167 = vmatpush2.msra.mxu0 0.0
    %168 = vmatprep.subr.mxu0 0.0
    %169 = vmatpush2.msra.mxu0 0.0
    %170 = vmatprep.subr.mxu0 0.0
    %171 = vmatpush2.msra.mxu0 0.0
    %172 = vmatprep.subr.mxu0 0.0
    %173 = vmatpush2.msra.mxu0 0.0
    %174 = vmatprep.subr.mxu0 0.0
    %175 = vmatpush2.msra.mxu0 0.0
    %176 = vmatprep.subr.mxu0 0.0
    %177 = vmatpush2.msra.mxu0 0.0
    %178 = vmatprep.subr.mxu0 0.0
    %179 = vmatpush2.msra.mxu0 0.0
    %180 = vmatprep.subr.mxu0 0.0
    %181 = vmatpush2.msra.mxu0 0.0
    %182 = vmatprep.subr.mxu0 0.0
    %183 = vmatpush2.msra.mxu0 0.0
    %184 = vmatprep.subr.mxu0 0.0
    %185 = vmatpush2.msra.mxu0 0.0
    %186 = vmatprep.subr.mxu0 0.0
    %187 = vmatpush2.msra.mxu0 0.0
    %188 = vmatprep.subr.mxu0 0.0
    %189 = vmatpush2.msra.mxu0 0.0
    %190 = vmatprep.subr.mxu0 0.0
    %191 = vmatpush2.msra.mxu0 0.0
    %192 = vmatprep.mubr.f32.mxu0 0.0
    %193 = vmatmul.mubr.f32.gmra.mxu0 %v126
    %v194 = vpop.f32.mrf.mxu0
    %v195 = vadd.f32 %v48, %v194
    %v196 = vpop.f32.mrf.mxu0
    %197 = vdwg.mxu0
    %s198 = scalar_lea.vmem [#allocation4], 146
    %v199 = vld [vmem:[%s198] ss:$8 sm:$0x3]
    %s200 = scalar_lea.vmem [#allocation4], 147
    %v201 = vld [vmem:[%s200] ss:$8 sm:$0x3]
    %s202 = scalar_lea.vmem [#allocation4], 148
    %v203 = vld [vmem:[%s202] ss:$8 sm:$0x3]
    %s204 = scalar_lea.vmem [#allocation4], 149
    %v205 = vld [vmem:[%s204] ss:$8 sm:$0x3]
    %v206 = vld [vmem:[#allocation4 + $0x96] ss:$0 sm:$0xff]
    %208 = vset.pattern.permute.xlu0 3
    %209 = vperm.xlu0 %208, %v195
    %v210 = vpop.permute.xlu0 %209
    %v213 = vlaneseq
    %v214 = vshrl.u32 %v213, 7
    %v215 = vsub.s32 0, %v214
    %v216 = vrot.slane %v199, %v215
    %v217 = vlaneseq
    %v218 = vshrl.u32 %v217, 7
    %v219 = vsub.s32 1, %v218
    %v220 = vrot.slane %v199, %v219
    %v223 = vmul.f32 %v210, %v216
    %v224 = vmul.f32 %v210, %v220
    %225 = vset.pattern.permute.xlu0 32
    %226 = vperm.xlu0 %225, %v37
    %v227 = vpop.permute.xlu0 %226
    %v230 = vlaneseq
    %v231 = vshrl.u32 %v230, 7
    %v232 = vsub.s32 0, %v231
    %v233 = vrot.slane %v201, %v232
    %v234 = vlaneseq
    %v235 = vshrl.u32 %v234, 7
    %v236 = vsub.s32 1, %v235
    %v237 = vrot.slane %v201, %v236
    %v240 = vmul.f32 %v227, %v233
    %v241 = vmul.f32 %v227, %v237
    %v242 = vadd.f32 %v223, %v240
    %v243 = vadd.f32 %v224, %v241
    %v245 = vlaneseq
    %v246 = vshrl.u32 %v245, 7
    %v247 = vsub.s32 0, %v246
    %v248 = vrot.slane %v203, %v247
    %v249 = vlaneseq
    %v250 = vshrl.u32 %v249, 7
    %v251 = vsub.s32 1, %v250
    %v252 = vrot.slane %v203, %v251
    %v255 = vadd.f32 %v242, %v248
    %v256 = vadd.f32 %v243, %v252
    %v257 = vmax.f32 %v255, 0.0
    %v258 = vmax.f32 %v256, 0.0
    %v259 = vand.u32 2147483647, %v255
    %v260 = vand.u32 2147483647, %v256
    %v261 = vsub.f32 0.0, %v259
    %v262 = vsub.f32 0.0, %v260
    %v263 = vmul.f32 %v261, 1.442695
    %v264 = vpow.pop %v263
    %v265 = vmul.f32 %v262, 1.442695
    %v266 = vpow.pop %v265
    %v267 = vadd.f32 %v264, 1.0
    %v268 = vlog2.pop %v267
    %v269 = vmul.f32 %v268, 0.6931472
    %v270 = vmul.f32 -0.5, %v264
    %v271 = vadd.f32 %v270, 1.0
    %v272 = vmul.f32 %v271, %v264
    %v273 = vand.u32 2147483647, %v264
    %vm274 = vcmp.lt.f32.partialorder %v273, 0.0004427343
    %v275 = vsel %vm274, %v272, %v269
    %v276 = vadd.f32 %v266, 1.0
    %v277 = vlog2.pop %v276
    %v278 = vmul.f32 %v277, 0.6931472
    %v279 = vmul.f32 -0.5, %v266
    %v280 = vadd.f32 %v279, 1.0
    %v281 = vmul.f32 %v280, %v266
    %v282 = vand.u32 2147483647, %v266
    %vm283 = vcmp.lt.f32.partialorder %v282, 0.0004427343
    %v284 = vsel %vm283, %v281, %v278
    %v285 = vadd.f32 %v257, %v275
    %v286 = vadd.f32 %v258, %v284
    %v288 = vlaneseq
    %v289 = vshrl.u32 %v288, 7
    %v290 = vsub.s32 0, %v289
    %v291 = vrot.slane %v205, %v290
    %v292 = vlaneseq
    %v293 = vshrl.u32 %v292, 7
    %v294 = vsub.s32 1, %v293
    %v295 = vrot.slane %v205, %v294
    %v298 = vmul.f32 %v285, %v291
    %v299 = vmul.f32 %v286, %v295
    %v300 = vadd.f32 %v298, %v299
    %301 = vadd.xlane.f32.xlu0 %v300
    %v302 = vpop.xlane.xlu0 %301
    %v303 = vadd.f32 %v302, %v206
    %v304 = vmax.f32 %v303, 0.0
    %v305 = vand.u32 2147483647, %v303
    %v306 = vsub.f32 0.0, %v305
    %v307 = vmul.f32 %v306, 1.442695
    %v308 = vpow.pop %v307
    %v309 = vadd.f32 %v308, 1.0
    %v310 = vlog2.pop %v309
    %v311 = vmul.f32 %v310, 0.6931472
    %v312 = vmul.f32 -0.5, %v308
    %v313 = vadd.f32 %v312, 1.0
    %v314 = vmul.f32 %v313, %v308
    %v315 = vand.u32 2147483647, %v308
    %vm316 = vcmp.lt.f32.partialorder %v315, 0.0004427343
    %v317 = vsel %vm316, %v314, %v311
    %v318 = vadd.f32 %v304, %v317
    %v319 = vlaneseq
    %v320 = vand.u32 %v319, 127
    %vm321 = vcmp.eq.s32.totalorder %v320, 3
    %323 = vset.pattern.permute.xlu0 0
    %324 = vperm.xlu0 %323, %v318
    %v325 = vpop.permute.xlu0 %324
    %v327 = vsel %vm321, %v325, %v195
    %vm328 = vcmask 31744
    %329 = vst.msk [vmem:[%s2] sm:$0xff] %vm328, %v327
    // Predicated region
    $region18: #{tpu_custom_call.1} parent=1 // pred_check
      _
    $region19: #{tpu_custom_call.1} parent=1 // pred_check_branch
      %331 = sbr.rel (0) target = $region21
    $region20: #{tpu_custom_call.1} parent=1 // pred_region
      _
    $region21: #{tpu_custom_call.1} parent=1 // pred_fallthru
      _
    // Predicated region
    $region22: #{tpu_custom_call.1} parent=1 // pred_check
      _
    $region23: #{tpu_custom_call.1} parent=1 // pred_check_branch
      %333 = sbr.rel (0) target = $region25
    $region24: #{tpu_custom_call.1} parent=1 // pred_region
      _
    $region25: #{tpu_custom_call.1} parent=1 // pred_fallthru
      _
    %334 = vsyncpa [#allocation3], 1
    %335 = vsyncpa [#allocation5], 1

</llo_original>
